<compile_context>
chip_gen: v6e
topology: v6e:2x2x1
jax: 0.10.0
libtpu: 0.0.40
codegen_flags: <defaults>
</compile_context>

<pallas_src>
import functools

import jax
import jax.numpy as jnp
from jax.experimental import pallas as pl
from jax.experimental.pallas import tpu as pltpu

EPS = 1e-5  # nn.InstanceNorm2d default eps


def _adain_kernel(gb_ref, x_ref, o_ref, *, hw_true):
    # x_ref:  (R, HW)  rows = flattened (batch, channel) instances.
    # gb_ref: (R, 2)   column 0 = (1 + gamma), column 1 = beta.
    x = x_ref[...].astype(jnp.float32)

    inv_hw = 1.0 / float(hw_true)
    s1 = jnp.sum(x, axis=-1, keepdims=True)              # (R, 1)
    s2 = jnp.sum(x * x, axis=-1, keepdims=True)          # (R, 1)
    mean = s1 * inv_hw
    # One-pass variance; clamp >= 0 to guard f32 cancellation.
    var = jnp.maximum(s2 * inv_hw - mean * mean, 0.0)
    inv_std = jax.lax.rsqrt(var + EPS)                   # EUP slot

    gb = gb_ref[...].astype(jnp.float32)                 # (R, 2)
    scale = gb[:, 0:1] * inv_std                         # (1+gamma)/std
    shift = gb[:, 1:2] - mean * scale                    # beta - mean*scale

    # Single fused pass over the slab.
    o_ref[...] = (x * scale + shift).astype(o_ref.dtype)


def adain(x, s, w, b):
    """x: (N, C, H, W), s: (N, SD), w: (2C, SD), b: (2C,)."""
    N, C, H, W = x.shape
    HW = H * W
    rows = N * C
    itemsize = jnp.dtype(x.dtype).itemsize

    # ---- fc hoisted to one batched MXU matmul; pre-fold (1 + gamma) --------
    h = (s.astype(jnp.float32) @ w.astype(jnp.float32).T
         + b.astype(jnp.float32))                         # (N, 2C)
    gamma, beta = h[:, :C], h[:, C:]
    gb = jnp.stack([1.0 + gamma, beta], axis=-1).reshape(rows, 2)

    x2 = x.reshape(rows, HW)                              # dense row layout

    # ---- generation-aware sizing --------------------------------------------
    try:
        vmem_cap = int(pltpu.get_tpu_info().vmem_capacity_bytes)
    except Exception:  # be conservative if the query is unavailable
        vmem_cap = 64 << 20
    if vmem_cap <= (64 << 20):            # v7x-class: 64 MiB physical VMEM
        tile_budget = 6 << 20             # x-input tile budget
        vmem_limit = min(48 << 20, vmem_cap - (8 << 20))
    else:                                 # v5e / v6e: 128 MiB VMEM
        tile_budget = 14 << 20
        vmem_limit = 64 << 20

    # Per-row VMEM footprint: in/out tiles double-buffered + f32 working set.
    row_bytes = HW * itemsize
    row_footprint = HW * (4 * itemsize + 8)
    if 8 * row_footprint > vmem_limit:
        # TODO(synk): split H*W onto a second "arbitrary" grid axis with a
        # running sum / sum-of-squares reduction for very large spatial sizes.
        raise NotImplementedError(
            "AdaIN Pallas kernel: an 8-row slab exceeds the VMEM budget")

    # Largest row tile (multiple of 8) whose x tile fits the budget.
    rows_padded = ((rows + 7) // 8) * 8
    row_tile = (tile_budget // row_bytes) // 8 * 8
    row_tile = max(8, min(row_tile, rows_padded))
    # Keep >= 4 grid steps when there are enough rows: lets the "parallel"
    # axis shard across v7x's two TensorCores and pipelines DMA vs compute.
    steps_target = 4
    if rows >= 8 * steps_target:
        row_tile = min(
            row_tile,
            max(8, ((rows + steps_target - 1) // steps_target) // 8 * 8))
    grid = (pl.cdiv(rows, row_tile),)

    cost = pl.CostEstimate(
        flops=int(5 * rows * HW),
        transcendentals=int(rows),
        bytes_accessed=int(2 * rows * HW * itemsize),
    )

    kernel = functools.partial(_adain_kernel, hw_true=HW)
    out = pl.pallas_call(
        kernel,
        out_shape=jax.ShapeDtypeStruct((rows, HW), x.dtype),
        grid_spec=pltpu.PrefetchScalarGridSpec(
            num_scalar_prefetch=0,
            grid=grid,
            in_specs=[
                pl.BlockSpec((row_tile, 2), lambda i: (i, 0)),    # (1+g, b)
                pl.BlockSpec((row_tile, HW), lambda i: (i, 0)),   # x rows
            ],
            out_specs=pl.BlockSpec((row_tile, HW), lambda i: (i, 0)),
        ),
        compiler_params=pltpu.CompilerParams(
            dimension_semantics=("parallel",),
            vmem_limit_bytes=int(vmem_limit),
        ),
        cost_estimate=cost,
    )(gb, x2)

    return out.reshape(N, C, H, W)


def adain_ref(x, s, w, b):
    """Pure-JAX reference matching the PyTorch module semantics."""
    h = s @ w.T + b                                  # (N, 2C)
    gamma, beta = jnp.split(h, 2, axis=1)            # (N, C) each
    mean = x.mean(axis=(2, 3), keepdims=True)
    var = ((x - mean) ** 2).mean(axis=(2, 3), keepdims=True)
    xn = (x - mean) / jnp.sqrt(var + EPS)
    return (1.0 + gamma)[:, :, None, None] * xn + beta[:, :, None, None]


if __name__ == "__main__":

    def run_case(N, C, H, W, SD, key):
        kx, ks, kw, kb = jax.random.split(key, 4)
        x = jax.random.normal(kx, (N, C, H, W), dtype=jnp.float32)
        s = jax.random.normal(ks, (N, SD), dtype=jnp.float32)
        # Deterministic fc params (Linear(style_dim, 2*num_features)).
        fc_w = jax.random.normal(kw, (2 * C, SD), dtype=jnp.float32) / jnp.sqrt(SD)
        fc_b = jax.random.normal(kb, (2 * C,), dtype=jnp.float32) * 0.1

        out = jax.block_until_ready(adain(x, s, fc_w, fc_b))
        ref = adain_ref(x, s, fc_w, fc_b)
        assert out.shape == (N, C, H, W)
        assert jnp.allclose(out, ref, rtol=1e-4, atol=1e-4), (
            f"mismatch vs reference for shape {(N, C, H, W)}")

    key = jax.random.PRNGKey(0)
    k1, k2 = jax.random.split(key)
    # Lane-dense case: HW % 128 == 0, C a multiple of 8.
    run_case(N=2, C=8, H=16, W=16, SD=16, key=k1)
    # Ragged case: HW % 128 != 0 and N*C not a multiple of the row tile
    # (exercises the masked-tail store and the partial last row block).
    run_case(N=2, C=5, H=12, W=12, SD=16, key=k2)

    print("KERNEL_OK")
</pallas_src>

<mosaic_0001>
module attributes {stable_mosaic.version = 11 : i64} {
  func.func @_adain_kernel(%arg0: i32, %arg1: memref<16x2xf32, #tpu.memory_space<vmem>>, %arg2: memref<16x256xf32, #tpu.memory_space<vmem>>, %arg3: memref<16x256xf32, #tpu.memory_space<vmem>>) attributes {dimension_semantics = [#tpu.dimension_semantics<parallel>], iteration_bounds = array<i64: 1>, scalar_prefetch = 0 : i64, scratch_operands = 0 : i64, tpu.core_type = #tpu.core_type<tc>, window_params = [{transform_indices = @transform_0, window_bounds = array<i64: 16, 2>}, {transform_indices = @transform_1, window_bounds = array<i64: 16, 256>}, {transform_indices = @transform_2, window_bounds = array<i64: 16, 256>}]} {
    %c0 = arith.constant 0 : index
    %c0_0 = arith.constant 0 : index
    %0 = vector.load %arg2[%c0, %c0_0] : memref<16x256xf32, #tpu.memory_space<vmem>>, vector<16x256xf32>
    %cst = arith.constant dense<0.000000e+00> : vector<16xf32>
    %1 = vector.multi_reduction <add>, %0, %cst [1] : vector<16x256xf32> to vector<16xf32>
    %2 = vector.shape_cast %1 : vector<16xf32> to vector<16x1xf32>
    %3 = arith.mulf %0, %0 : vector<16x256xf32>
    %cst_1 = arith.constant dense<0.000000e+00> : vector<16xf32>
    %4 = vector.multi_reduction <add>, %3, %cst_1 [1] : vector<16x256xf32> to vector<16xf32>
    %5 = vector.shape_cast %4 : vector<16xf32> to vector<16x1xf32>
    %cst_2 = arith.constant 3.906250e-03 : f32
    %6 = vector.broadcast %cst_2 : f32 to vector<16x1xf32>
    %7 = arith.mulf %2, %6 : vector<16x1xf32>
    %cst_3 = arith.constant 3.906250e-03 : f32
    %8 = vector.broadcast %cst_3 : f32 to vector<16x1xf32>
    %9 = arith.mulf %5, %8 : vector<16x1xf32>
    %10 = arith.mulf %7, %7 : vector<16x1xf32>
    %11 = arith.subf %9, %10 : vector<16x1xf32>
    %cst_4 = arith.constant 0.000000e+00 : f32
    %12 = vector.broadcast %cst_4 : f32 to vector<16x1xf32>
    %13 = arith.maximumf %11, %12 : vector<16x1xf32>
    %cst_5 = arith.constant 9.99999974E-6 : f32
    %14 = vector.broadcast %cst_5 : f32 to vector<16x1xf32>
    %15 = arith.addf %13, %14 : vector<16x1xf32>
    %16 = math.rsqrt %15 : vector<16x1xf32>
    %c0_6 = arith.constant 0 : index
    %c0_7 = arith.constant 0 : index
    %17 = vector.load %arg1[%c0_6, %c0_7] : memref<16x2xf32, #tpu.memory_space<vmem>>, vector<16x2xf32>
    %18 = vector.extract_strided_slice %17 {offsets = [0, 0], sizes = [16, 1], strides = [1, 1]} : vector<16x2xf32> to vector<16x1xf32>
    %19 = arith.mulf %18, %16 : vector<16x1xf32>
    %20 = vector.extract_strided_slice %17 {offsets = [0, 1], sizes = [16, 1], strides = [1, 1]} : vector<16x2xf32> to vector<16x1xf32>
    %21 = arith.mulf %7, %19 : vector<16x1xf32>
    %22 = arith.subf %20, %21 : vector<16x1xf32>
    %23 = vector.broadcast %19 : vector<16x1xf32> to vector<16x256xf32>
    %24 = arith.mulf %0, %23 : vector<16x256xf32>
    %25 = vector.broadcast %22 : vector<16x1xf32> to vector<16x256xf32>
    %26 = arith.addf %24, %25 : vector<16x256xf32>
    %c0_8 = arith.constant 0 : index
    %c0_9 = arith.constant 0 : index
    %27 = vector.load %arg3[%c0_8, %c0_9] : memref<16x256xf32, #tpu.memory_space<vmem>>, vector<16x256xf32>
    tpu.vector_store %arg3[%c0_8, %c0_9], %26 {strides = array<i32>} : memref<16x256xf32, #tpu.memory_space<vmem>>, vector<16x256xf32>,
    return
  }
  func.func @transform_0(%arg0: i32) -> (i32, i32) {
    %c0_i32 = arith.constant 0 : i32
    %c0_i32_0 = arith.constant 0 : i32
    return %arg0, %c0_i32 : i32, i32
  }
  func.func @transform_1(%arg0: i32) -> (i32, i32) {
    %c0_i32 = arith.constant 0 : i32
    %c0_i32_0 = arith.constant 0 : i32
    return %arg0, %c0_i32 : i32, i32
  }
  func.func @transform_2(%arg0: i32) -> (i32, i32) {
    %c0_i32 = arith.constant 0 : i32
    %c0_i32_0 = arith.constant 0 : i32
    return %arg0, %c0_i32 : i32, i32
  }
}

</mosaic_0001>

<llo_original>
// kernel: tpu_custom_call.1
$region0: #{tpu_custom_call.1}
  #allocation0 [shape = 'u32[]', space=smem, size = 0x4, offset = 0x4, fixed_abs, tag = 'smem constant byte address 0x4 - core index']
  #allocation1 [shape = 'u32[144,128]{1,0:T(1,128)}', space=vmem, size = 0x12000, scoped, tag = 'internal scratch']
  %s0 = inlined_call_operand.vmem [shape: f32[16,2], index: 0, kind: input, shape index: {}]
  %s1 = inlined_call_operand.hbm [shape: f32[16,256], index: 1, kind: input, shape index: {}]
  %s2 = inlined_call_operand.hbm [shape: f32[16,256], index: 2, kind: output, shape index: {}]
  %s3 = sld [smem:[#allocation0]]
  $region22: #{tpu_custom_call.1} parent=0
    _
  %s5 = ssub.s32 1, %s3
  %s6 = scalar_select 0, %s5, %s3
  $region1: #{tpu_custom_call.1} parent=0
    #allocation2 [shape = 'u8[16384]{0}', space=vmem, size = 0x4000, scoped, tag = 'input window, operand 1, single buffered']
    #allocation3 [shape = 's32[1]{0}', space=sflag, size = 0x4, scoped, tag = 'scoped memory for tpu_custom_call.1']
    #allocation4 [shape = 's32[1]{0}', space=sflag, size = 0x4, scoped, tag = 'scoped memory for tpu_custom_call.1']
    #allocation5 [shape = 'u8[16384]{0}', space=vmem, size = 0x4000, scoped, tag = 'output window, operand 0, single buffered']
    %7 = vsyncpa [#allocation3], 0
    %8 = vsyncpa [#allocation4], 0
    // Predicated region
    $region2: #{tpu_custom_call.1} parent=1 // pred_check
      _
    $region3: #{tpu_custom_call.1} parent=1 // pred_check_branch
      %10 = sbr.rel (0) target = $region5
    $region4: #{tpu_custom_call.1} parent=1 // pred_region
      _
    $region5: #{tpu_custom_call.1} parent=1 // pred_fallthru
      _
    // Predicated region
    $region6: #{tpu_custom_call.1} parent=1 // pred_check
      _
    $region7: #{tpu_custom_call.1} parent=1 // pred_check_branch
      %12 = sbr.rel (0) target = $region9
    $region8: #{tpu_custom_call.1} parent=1 // pred_region
      %s14 = ssub.s32 512, 512
      %15 = vsyncadd [#allocation3], %s14
      %s16 = sshll.u32 [#allocation2], 4
      %s17 = int_to_ptr.vmem [resolvable:$true] %s16
      %22 = dma.hbm_to_vmem [thread:$0]  %s1, 512, %s17, [#allocation3], 256, 256, 16
    $region9: #{tpu_custom_call.1} parent=1 // pred_fallthru
      _
    // Predicated region
    $region10: #{tpu_custom_call.1} parent=1 // pred_check
      _
    $region11: #{tpu_custom_call.1} parent=1 // pred_check_branch
      %24 = sbr.rel (0) target = $region13
    $region12: #{tpu_custom_call.1} parent=1 // pred_region
      %25 = dma.done [#allocation3], 512
    $region13: #{tpu_custom_call.1} parent=1 // pred_fallthru
      _
    %v26 = vld [vmem:[#allocation2] sm:$0xff]
    %v27 = vld [vmem:[#allocation2 + $0x8] sm:$0xff]
    %v28 = vld [vmem:[#allocation2 + $0x10] sm:$0xff]
    %v29 = vld [vmem:[#allocation2 + $0x18] sm:$0xff]
    %v30 = vadd.f32 %v26, %v27
    %31 = vadd.xlane.f32.xlu0 %v30
    %v32 = vpop.xlane.xlu0 %31
    %v33 = vadd.f32 %v28, %v29
    %34 = vadd.xlane.f32.xlu0 %v33
    %v35 = vpop.xlane.xlu0 %34
    %v36 = vmul.f32 %v26, %v26
    %v37 = vmul.f32 %v27, %v27
    %v38 = vmul.f32 %v28, %v28
    %v39 = vmul.f32 %v29, %v29
    %v40 = vadd.f32 %v36, %v37
    %41 = vadd.xlane.f32.xlu0 %v40
    %v42 = vpop.xlane.xlu0 %41
    %v43 = vadd.f32 %v38, %v39
    %44 = vadd.xlane.f32.xlu0 %v43
    %v45 = vpop.xlane.xlu0 %44
    %v46 = vmul.f32 %v32, 0.00390625
    %v47 = vmul.f32 %v35, 0.00390625
    %v48 = vmul.f32 %v42, 0.00390625
    %v49 = vmul.f32 %v45, 0.00390625
    %v50 = vmul.f32 %v46, %v46
    %v51 = vmul.f32 %v47, %v47
    %v52 = vsub.f32 %v48, %v50
    %v53 = vsub.f32 %v49, %v51
    %v54 = vmax.f32 %v52, 0.0
    %v55 = vmax.f32 %v53, 0.0
    %v56 = vadd.f32 %v54, 1e-05
    %v57 = vadd.f32 %v55, 1e-05
    %v58 = vrsqrt.pop %v56
    %v59 = vrsqrt.pop %v57
    %v60 = vld [vmem:[%s0] sm:$0xff]
    %v61 = vld [vmem:[%s0 + $0x8] sm:$0xff]
    %v62 = vmul.f32 %v60, %v58
    %v63 = vmul.f32 %v61, %v59
    %v64 = vmul.f32 %v46, %v62
    %v65 = vmul.f32 %v47, %v63
    %68 = vrot.lane.b32.xlu0 %v64, 1
    %v69 = vpop.permute.xlu0 %68
    %70 = vrot.lane.b32.xlu0 %v65, 1
    %v71 = vpop.permute.xlu0 %70
    %v74 = vsub.f32 %v60, %v69
    %v75 = vsub.f32 %v61, %v71
    %77 = vset.pattern.permute.xlu0 0
    %78 = vperm.xlu0 %77, %v62
    %v79 = vpop.permute.xlu0 %78
    %82 = vset.pattern.permute.xlu0 0
    %83 = vperm.xlu0 %82, %v63
    %v84 = vpop.permute.xlu0 %83
    %v86 = vmul.f32 %v26, %v79
    %v87 = vmul.f32 %v27, %v79
    %v88 = vmul.f32 %v28, %v84
    %v89 = vmul.f32 %v29, %v84
    %91 = vset.pattern.permute.xlu0 1
    %92 = vperm.xlu0 %91, %v74
    %v93 = vpop.permute.xlu0 %92
    %96 = vset.pattern.permute.xlu0 1
    %97 = vperm.xlu0 %96, %v75
    %v98 = vpop.permute.xlu0 %97
    %v100 = vadd.f32 %v86, %v93
    %v101 = vadd.f32 %v87, %v93
    %v102 = vadd.f32 %v88, %v98
    %v103 = vadd.f32 %v89, %v98
    %104 = vst [vmem:[#allocation5] sm:$0xff] %v100
    %105 = vst [vmem:[#allocation5 + $0x8] sm:$0xff] %v101
    %106 = vst [vmem:[#allocation5 + $0x10] sm:$0xff] %v102
    %107 = vst [vmem:[#allocation5 + $0x18] sm:$0xff] %v103
    // Predicated region
    $region14: #{tpu_custom_call.1} parent=1 // pred_check
      _
    $region15: #{tpu_custom_call.1} parent=1 // pred_check_branch
      %109 = sbr.rel (0) target = $region17
    $region16: #{tpu_custom_call.1} parent=1 // pred_region
      %s111 = ssub.s32 512, 512
      %112 = vsyncadd [#allocation4], %s111
      %s113 = sshll.u32 [#allocation5], 4
      %s114 = int_to_ptr.vmem [resolvable:$true] %s113
      %119 = dma.vmem_to_hbm [thread:$0]  %s114, 512, %s2, [#allocation4], 256, 256, 16
    $region17: #{tpu_custom_call.1} parent=1 // pred_fallthru
      _
    // Predicated region
    $region18: #{tpu_custom_call.1} parent=1 // pred_check
      _
    $region19: #{tpu_custom_call.1} parent=1 // pred_check_branch
      %121 = sbr.rel (0) target = $region21
    $region20: #{tpu_custom_call.1} parent=1 // pred_region
      %122 = dma.done [#allocation4], 512
    $region21: #{tpu_custom_call.1} parent=1 // pred_fallthru
      _
    %123 = vsyncpa [#allocation3], 1
    %124 = vsyncpa [#allocation4], 1

</llo_original>
